<compile_context>
chip_gen: v5e
topology: v5e:2x2
jax: 0.10.0
libtpu: 0.0.40
codegen_flags: <defaults>
</compile_context>

<pallas_src>
import functools

import jax
import jax.numpy as jnp
from jax.experimental import pallas as pl
from jax.experimental.pallas import tpu as pltpu


# ----------------------------------------------------------------------------
# Fused kernel: all GCN layers in one grid-less pallas_call (transposed layout)
# ----------------------------------------------------------------------------
def _fused_gnn_kernel(*refs, num_layers):
    """refs = (adj_t, ht, wt0, bt0, wt1, bt1, ..., out_t).  Everything resident in VMEM.

    adj_t : [N, N]        bf16   A_hat^T
    ht    : [F0, N]       bf16   x^T
    wt_i  : [2*Fout, Fin] bf16   rows = [W^T ; W_res^T]
    bt_i  : [Fout, 1]     f32    b + b_res
    out_t : [Fout_last, N]
    """
    adj_t = refs[0][...]
    ht = refs[1][...]
    out_ref = refs[2 + 2 * num_layers]

    out = None
    for i in range(num_layers):
        wt = refs[2 + 2 * i][...]
        bt = refs[3 + 2 * i][...]
        fout = wt.shape[0] // 2
        # Single x-side matmul for GCN + residual weights; lane axis = N (lane-dense).
        wh = jnp.dot(wt, ht, preferred_element_type=jnp.float32)            # [2*Fout, N]
        # NOTE: the GCN partial is re-rounded to bf16 before the N^2 aggregation matmul
        # (same as the reference mirror; small deviation from pure-f32 GCNConv).
        agg = jnp.dot(wh[:fout].astype(jnp.bfloat16), adj_t,
                      preferred_element_type=jnp.float32)                   # [Fout, N]
        out = agg + wh[fout:] + bt                                          # f32 epilogue
        if i != num_layers - 1:
            out = jnp.maximum(out, 0.0)          # ReLU (f32; v5e has no bf16 VPU)
            ht = out.astype(jnp.bfloat16)        # next layer's MXU operand
        # dropout(p=0.0) / eval mode -> identity.
    out_ref[...] = out.astype(out_ref.dtype)


# ----------------------------------------------------------------------------
# Per-layer row-tiled kernel for large graphs (A_hat does not fit VMEM)
# ----------------------------------------------------------------------------
def _gcn_layer_tiled_kernel(adjt_ref, ht_full_ref, ht_tile_ref, wt_ref, bt_ref,
                            out_ref, *, apply_relu):
    """One GCN+residual layer, tiled over output columns (== A_hat rows).

    adjt_ref    : [N, TN]        bf16   column tile of A_hat^T
    ht_full_ref : [Fin, N]       bf16   full H^T (resident across the grid)
    ht_tile_ref : [Fin, TN]      bf16   column tile of H^T (for the residual path)
    wt_ref      : [2*Fout, Fin]  bf16
    bt_ref      : [Fout, 1]      f32
    out_ref     : [Fout, TN]
    """
    wt = wt_ref[...]
    fout = wt.shape[0] // 2
    # W^T @ H^T is recomputed per tile (cheap vs the N^2 aggregation matmul); a scratch
    # carry would break under the "parallel" grid axis on megacore parts, so we don't.
    wh_gcn = jnp.dot(wt[:fout], ht_full_ref[...],
                     preferred_element_type=jnp.float32)                    # [Fout, N]
    agg = jnp.dot(wh_gcn.astype(jnp.bfloat16), adjt_ref[...],
                  preferred_element_type=jnp.float32)                       # [Fout, TN]
    res = jnp.dot(wt[fout:], ht_tile_ref[...],
                  preferred_element_type=jnp.float32)                       # [Fout, TN]
    out = agg + res + bt_ref[...]
    if apply_relu:
        out = jnp.maximum(out, 0.0)
    out_ref[...] = out.astype(out_ref.dtype)


# ----------------------------------------------------------------------------
# Wrappers
# ----------------------------------------------------------------------------
def _physical_vmem_bytes():
    try:
        return int(pltpu.get_tpu_info().vmem_capacity_bytes)
    except Exception:
        return 64 << 20  # conservative (v7x per-TensorCore VMEM)


def _pick_row_tile(n, phys_vmem):
    """Largest lane-aligned A_hat^T column tile that fits comfortably in VMEM."""
    budget = max(phys_vmem - (24 << 20), 8 << 20)
    per_col = 4 * n + 1024          # double-buffered bf16 adj^T column + act/out columns
    tn = int(budget // per_col)
    tn = max(128, min(tn, 2048, n))
    if tn != n:
        tn = max(128, (tn // 128) * 128)
    return tn


def gnn_forward(adj, x, params, *, force_tiled=False, row_tile=None):
    """Forward pass.  adj: [N, N] f32 normalized adjacency (A_hat); x: [N, F0] f32;
    params: list of (W, b, W_res, b_res) in f32.  Returns [N, out_dim] f32."""
    n = x.shape[0]
    num_layers = len(params)
    out_dim = params[-1][0].shape[1]

    # Feature-major operands: lane axis = N everywhere.
    adj_t = adj.T.astype(jnp.bfloat16)                                   # A_hat^T
    ht = x.T.astype(jnp.bfloat16)                                        # [F0, N]
    wts, bts = [], []
    for (w, b, wr, br) in params:
        wts.append(jnp.concatenate([w.T, wr.T], axis=0).astype(jnp.bfloat16))  # [2*Fout, Fin]
        bts.append((b + br).reshape(-1, 1).astype(jnp.float32))                # [Fout, 1]

    phys_vmem = _physical_vmem_bytes()

    # Rough resident-footprint estimate for the fused kernel (bf16 adj/acts + f32 temps).
    widths = [x.shape[1]] + [w.shape[1] for (w, _, _, _) in params]
    est = 2 * n * n
    est += sum(2 * f * n for f in widths)
    est += sum(12 * w.shape[1] * n for (w, _, _, _) in params)
    est += sum(wt.size * 2 + bt.size * 4 for wt, bt in zip(wts, bts))
    fused_fits = est <= phys_vmem - (8 << 20)

    if fused_fits and not force_tiled:
        flat = [adj_t, ht]
        for wt, bt in zip(wts, bts):
            flat += [wt, bt]
        limit = int(min(max(2 * est + (4 << 20), 32 << 20), phys_vmem - (4 << 20)))
        limit = max(limit, 16 << 20)
        out_t = pl.pallas_call(
            functools.partial(_fused_gnn_kernel, num_layers=num_layers),
            out_shape=jax.ShapeDtypeStruct((out_dim, n), jnp.float32),
            compiler_params=pltpu.CompilerParams(vmem_limit_bytes=limit),
        )(*flat)
    else:
        # Per-layer row-tiled path: tile over A_hat rows (= A_hat^T columns).
        tn = row_tile if row_tile is not None else _pick_row_tile(n, phys_vmem)
        tn = min(tn, n)
        if tn != n:
            tn = max(128, (tn // 128) * 128)     # lane-aligned tile (or full N)

        h_cur = ht
        for i, (wt, bt) in enumerate(zip(wts, bts)):
            apply_relu = i != num_layers - 1
            two_fout, fin = wt.shape
            fout = two_fout // 2
            out_dtype = jnp.bfloat16 if apply_relu else jnp.float32
            limit = 2 * (2 * n * tn) + 2 * fin * n + 16 * fout * tn + wt.size * 2
            limit = int(min(max(limit + (8 << 20), 32 << 20), phys_vmem - (4 << 20)))
            limit = max(limit, 16 << 20)
            h_cur = pl.pallas_call(
                functools.partial(_gcn_layer_tiled_kernel, apply_relu=apply_relu),
                out_shape=jax.ShapeDtypeStruct((fout, n), out_dtype),
                grid=(pl.cdiv(n, tn),),
                in_specs=[
                    pl.BlockSpec((n, tn), lambda j: (0, j)),        # A_hat^T column tile
                    pl.BlockSpec((fin, n), lambda j: (0, 0)),       # full H^T (resident)
                    pl.BlockSpec((fin, tn), lambda j: (0, j)),      # H^T column tile
                    pl.BlockSpec((two_fout, fin), lambda j: (0, 0)),
                    pl.BlockSpec((fout, 1), lambda j: (0, 0)),
                ],
                out_specs=pl.BlockSpec((fout, tn), lambda j: (0, j)),
                compiler_params=pltpu.CompilerParams(
                    dimension_semantics=("parallel",),              # 2 TCs on v7x
                    vmem_limit_bytes=limit),
            )(adj_t, h_cur, h_cur, wt, bt)
        out_t = h_cur

    return out_t.T.astype(jnp.float32)      # back to [N, out_dim]


# ----------------------------------------------------------------------------
# Glue: normalized adjacency, parameter init, references
# ----------------------------------------------------------------------------
def build_normalized_adjacency(edge_index, num_nodes):
    """Dense D^{-1/2}(A + I)D^{-1/2} matching PyG GCNConv semantics.

    Messages flow src -> dst (row = target); the edge list is NOT symmetrized; self-loops
    already present are not double counted.  (Duplicate edges deduplicate in the dense
    representation, unlike PyG's scatter-add; differs only if edge_index has duplicates.)
    """
    src, dst = edge_index[0], edge_index[1]
    adj = jnp.zeros((num_nodes, num_nodes), jnp.float32)
    adj = adj.at[dst, src].set(1.0)
    adj = jnp.maximum(adj, jnp.eye(num_nodes, dtype=jnp.float32))
    deg = jnp.sum(adj, axis=1)
    dinv = jnp.where(deg > 0, 1.0 / jnp.sqrt(deg), 0.0)
    return dinv[:, None] * adj * dinv[None, :]


def init_params(key, num_features):
    """Deterministic params per layer: (W, b, W_res, b_res)."""
    params = []
    for fin, fout in zip(num_features[:-1], num_features[1:]):
        key, k1, k2, k3, k4 = jax.random.split(key, 5)
        scale = 1.0 / jnp.sqrt(jnp.float32(fin))
        w = jax.random.normal(k1, (fin, fout), jnp.float32) * scale
        b = jax.random.normal(k2, (1, fout), jnp.float32) * 0.01
        wr = jax.random.normal(k3, (fin, fout), jnp.float32) * scale
        br = jax.random.normal(k4, (1, fout), jnp.float32) * 0.01
        params.append((w, b, wr, br))
    return params


def gnn_forward_reference(adj, x, params):
    """Pure-JAX mirror of the kernel math (transposed, bf16 operands, f32 accumulate)."""
    adj_t = adj.T.astype(jnp.bfloat16)
    ht = x.T.astype(jnp.bfloat16)
    num_layers = len(params)
    out = None
    for i, (w, b, wr, br) in enumerate(params):
        wt = jnp.concatenate([w.T, wr.T], axis=0).astype(jnp.bfloat16)
        bt = (b + br).reshape(-1, 1).astype(jnp.float32)
        fout = w.shape[1]
        wh = jnp.dot(wt, ht, preferred_element_type=jnp.float32)
        agg = jnp.dot(wh[:fout].astype(jnp.bfloat16), adj_t,
                      preferred_element_type=jnp.float32)
        out = agg + wh[fout:] + bt
        if i != num_layers - 1:
            out = jnp.maximum(out, 0.0)
            ht = out.astype(jnp.bfloat16)
    return out.T.astype(jnp.float32)


def gnn_forward_f32_reference(adj, x, params):
    """Pure f32 GCNConv + Linear residual semantics (sanity bound on bf16 drift)."""
    h = x
    num_layers = len(params)
    for i, (w, b, wr, br) in enumerate(params):
        out = adj @ (h @ w) + b + h @ wr + br
        if i != num_layers - 1:
            out = jnp.maximum(out, 0.0)
        h = out
    return h


if __name__ == "__main__":
    INPUT_DIM, HIDDEN_DIM, OUTPUT_DIM, NUM_HIDDEN_LAYERS = 16, 32, 8, 2
    num_features = [INPUT_DIM] + [HIDDEN_DIM] * NUM_HIDDEN_LAYERS + [OUTPUT_DIM]

    key = jax.random.PRNGKey(0)
    kx, ke, kp, kx2, ke2 = jax.random.split(key, 5)
    params = init_params(kp, num_features)

    # ---- small graph: fully fused single-call path ----
    N, E = 64, 128
    x = jax.random.normal(kx, (N, INPUT_DIM), jnp.float32)
    edge_index = jax.random.randint(ke, (2, E), 0, N, jnp.int32)
    adj = build_normalized_adjacency(edge_index, N)

    out = jax.block_until_ready(gnn_forward(adj, x, params))
    assert out.shape == (N, OUTPUT_DIM), out.shape
    ref = gnn_forward_reference(adj, x, params)
    assert jnp.allclose(out, ref, atol=1e-4, rtol=1e-4), "fused kernel mismatch vs bf16 mirror"
    ref_f32 = gnn_forward_f32_reference(adj, x, params)
    assert jnp.allclose(out, ref_f32, atol=0.35, rtol=0.05), "drifted too far from f32 GCN semantics"

    # ---- larger graph (N multiple of 128): exercise the row-tiled 'parallel' path ----
    N2, E2 = 256, 1024
    x2 = jax.random.normal(kx2, (N2, INPUT_DIM), jnp.float32)
    edge_index2 = jax.random.randint(ke2, (2, E2), 0, N2, jnp.int32)
    adj2 = build_normalized_adjacency(edge_index2, N2)

    out_tiled = jax.block_until_ready(
        gnn_forward(adj2, x2, params, force_tiled=True, row_tile=128))
    assert out_tiled.shape == (N2, OUTPUT_DIM), out_tiled.shape
    ref2 = gnn_forward_reference(adj2, x2, params)
    assert jnp.allclose(out_tiled, ref2, atol=2e-3, rtol=2e-3), "tiled kernel mismatch vs bf16 mirror"

    print("KERNEL_OK")
</pallas_src>

<mosaic_0001>
module attributes {stable_mosaic.version = 11 : i64} {
  func.func @_fused_gnn_kernel(%arg0: memref<64x64xbf16, #tpu.memory_space<vmem>>, %arg1: memref<16x64xbf16, #tpu.memory_space<vmem>>, %arg2: memref<64x16xbf16, #tpu.memory_space<vmem>>, %arg3: memref<32x1xf32, #tpu.memory_space<vmem>>, %arg4: memref<64x32xbf16, #tpu.memory_space<vmem>>, %arg5: memref<32x1xf32, #tpu.memory_space<vmem>>, %arg6: memref<16x32xbf16, #tpu.memory_space<vmem>>, %arg7: memref<8x1xf32, #tpu.memory_space<vmem>>, %arg8: memref<8x64xf32, #tpu.memory_space<vmem>>) attributes {dimension_semantics = [], scalar_prefetch = 0 : i64, scratch_operands = 0 : i64, tpu.core_type = #tpu.core_type<tc>} {
    %c0 = arith.constant 0 : index
    %c0_0 = arith.constant 0 : index
    %0 = vector.load %arg0[%c0, %c0_0] : memref<64x64xbf16, #tpu.memory_space<vmem>>, vector<64x64xbf16>
    %c0_1 = arith.constant 0 : index
    %c0_2 = arith.constant 0 : index
    %1 = vector.load %arg1[%c0_1, %c0_2] : memref<16x64xbf16, #tpu.memory_space<vmem>>, vector<16x64xbf16>
    %c0_3 = arith.constant 0 : index
    %c0_4 = arith.constant 0 : index
    %2 = vector.load %arg2[%c0_3, %c0_4] : memref<64x16xbf16, #tpu.memory_space<vmem>>, vector<64x16xbf16>
    %c0_5 = arith.constant 0 : index
    %c0_6 = arith.constant 0 : index
    %3 = vector.load %arg3[%c0_5, %c0_6] : memref<32x1xf32, #tpu.memory_space<vmem>>, vector<32x1xf32>
    %cst = arith.constant dense<0.000000e+00> : vector<64x64xf32>
    %4 = tpu.matmul %2, %1, %cst {dimension_numbers = #tpu.dot_dimension_numbers<[1], [0], [0], [1], [0, 0, 1, 1], [], []>} : vector<64x16xbf16>, vector<16x64xbf16>, vector<64x64xf32> -> vector<64x64xf32>
    %5 = vector.extract_strided_slice %4 {offsets = [0, 0], sizes = [32, 64], strides = [1, 1]} : vector<64x64xf32> to vector<32x64xf32>
    %6 = arith.truncf %5 : vector<32x64xf32> to vector<32x64xbf16>
    %cst_7 = arith.constant dense<0.000000e+00> : vector<32x64xf32>
    %7 = tpu.matmul %6, %0, %cst_7 {dimension_numbers = #tpu.dot_dimension_numbers<[1], [0], [0], [1], [0, 0, 1, 1], [], []>} : vector<32x64xbf16>, vector<64x64xbf16>, vector<32x64xf32> -> vector<32x64xf32>
    %8 = vector.extract_strided_slice %4 {offsets = [32, 0], sizes = [32, 64], strides = [1, 1]} : vector<64x64xf32> to vector<32x64xf32>
    %9 = arith.addf %7, %8 : vector<32x64xf32>
    %10 = vector.broadcast %3 : vector<32x1xf32> to vector<32x64xf32>
    %11 = arith.addf %9, %10 : vector<32x64xf32>
    %cst_8 = arith.constant 0.000000e+00 : f32
    %12 = vector.broadcast %cst_8 : f32 to vector<32x64xf32>
    %13 = arith.maximumf %11, %12 : vector<32x64xf32>
    %14 = arith.truncf %13 : vector<32x64xf32> to vector<32x64xbf16>
    %c0_9 = arith.constant 0 : index
    %c0_10 = arith.constant 0 : index
    %15 = vector.load %arg4[%c0_9, %c0_10] : memref<64x32xbf16, #tpu.memory_space<vmem>>, vector<64x32xbf16>
    %c0_11 = arith.constant 0 : index
    %c0_12 = arith.constant 0 : index
    %16 = vector.load %arg5[%c0_11, %c0_12] : memref<32x1xf32, #tpu.memory_space<vmem>>, vector<32x1xf32>
    %cst_13 = arith.constant dense<0.000000e+00> : vector<64x64xf32>
    %17 = tpu.matmul %15, %14, %cst_13 {dimension_numbers = #tpu.dot_dimension_numbers<[1], [0], [0], [1], [0, 0, 1, 1], [], []>} : vector<64x32xbf16>, vector<32x64xbf16>, vector<64x64xf32> -> vector<64x64xf32>
    %18 = vector.extract_strided_slice %17 {offsets = [0, 0], sizes = [32, 64], strides = [1, 1]} : vector<64x64xf32> to vector<32x64xf32>
    %19 = arith.truncf %18 : vector<32x64xf32> to vector<32x64xbf16>
    %cst_14 = arith.constant dense<0.000000e+00> : vector<32x64xf32>
    %20 = tpu.matmul %19, %0, %cst_14 {dimension_numbers = #tpu.dot_dimension_numbers<[1], [0], [0], [1], [0, 0, 1, 1], [], []>} : vector<32x64xbf16>, vector<64x64xbf16>, vector<32x64xf32> -> vector<32x64xf32>
    %21 = vector.extract_strided_slice %17 {offsets = [32, 0], sizes = [32, 64], strides = [1, 1]} : vector<64x64xf32> to vector<32x64xf32>
    %22 = arith.addf %20, %21 : vector<32x64xf32>
    %23 = vector.broadcast %16 : vector<32x1xf32> to vector<32x64xf32>
    %24 = arith.addf %22, %23 : vector<32x64xf32>
    %cst_15 = arith.constant 0.000000e+00 : f32
    %25 = vector.broadcast %cst_15 : f32 to vector<32x64xf32>
    %26 = arith.maximumf %24, %25 : vector<32x64xf32>
    %27 = arith.truncf %26 : vector<32x64xf32> to vector<32x64xbf16>
    %c0_16 = arith.constant 0 : index
    %c0_17 = arith.constant 0 : index
    %28 = vector.load %arg6[%c0_16, %c0_17] : memref<16x32xbf16, #tpu.memory_space<vmem>>, vector<16x32xbf16>
    %c0_18 = arith.constant 0 : index
    %c0_19 = arith.constant 0 : index
    %29 = vector.load %arg7[%c0_18, %c0_19] : memref<8x1xf32, #tpu.memory_space<vmem>>, vector<8x1xf32>
    %cst_20 = arith.constant dense<0.000000e+00> : vector<16x64xf32>
    %30 = tpu.matmul %28, %27, %cst_20 {dimension_numbers = #tpu.dot_dimension_numbers<[1], [0], [0], [1], [0, 0, 1, 1], [], []>} : vector<16x32xbf16>, vector<32x64xbf16>, vector<16x64xf32> -> vector<16x64xf32>
    %31 = vector.extract_strided_slice %30 {offsets = [0, 0], sizes = [8, 64], strides = [1, 1]} : vector<16x64xf32> to vector<8x64xf32>
    %32 = arith.truncf %31 : vector<8x64xf32> to vector<8x64xbf16>
    %cst_21 = arith.constant dense<0.000000e+00> : vector<8x64xf32>
    %33 = tpu.matmul %32, %0, %cst_21 {dimension_numbers = #tpu.dot_dimension_numbers<[1], [0], [0], [1], [0, 0, 1, 1], [], []>} : vector<8x64xbf16>, vector<64x64xbf16>, vector<8x64xf32> -> vector<8x64xf32>
    %34 = vector.extract_strided_slice %30 {offsets = [8, 0], sizes = [8, 64], strides = [1, 1]} : vector<16x64xf32> to vector<8x64xf32>
    %35 = arith.addf %33, %34 : vector<8x64xf32>
    %36 = vector.broadcast %29 : vector<8x1xf32> to vector<8x64xf32>
    %37 = arith.addf %35, %36 : vector<8x64xf32>
    %c0_22 = arith.constant 0 : index
    %c0_23 = arith.constant 0 : index
    %38 = vector.load %arg8[%c0_22, %c0_23] : memref<8x64xf32, #tpu.memory_space<vmem>>, vector<8x64xf32>
    tpu.vector_store %arg8[%c0_22, %c0_23], %37 {strides = array<i32>} : memref<8x64xf32, #tpu.memory_space<vmem>>, vector<8x64xf32>,
    return
  }
}

</mosaic_0001>

<llo_original>
// kernel: tpu_custom_call.1
$region0: #{tpu_custom_call.1}
  #allocation0 [shape = 'u32[]', space=smem, size = 0x4, offset = 0x4, fixed_abs, tag = 'smem constant byte address 0x4 - core index']
  #allocation1 [shape = 'u32[72,128]{1,0:T(1,128)}', space=vmem, size = 0x9000, scoped, tag = 'internal scratch']
  %s0 = inlined_call_operand.vmem [shape: bf16[64,64], index: 0, kind: input, shape index: {}]
  %s1 = inlined_call_operand.vmem [shape: bf16[16,64], index: 1, kind: input, shape index: {}]
  %s2 = inlined_call_operand.vmem [shape: bf16[64,16], index: 2, kind: input, shape index: {}]
  %s3 = inlined_call_operand.vmem [shape: f32[32,1], index: 3, kind: input, shape index: {}]
  %s4 = inlined_call_operand.vmem [shape: bf16[64,32], index: 4, kind: input, shape index: {}]
  %s5 = inlined_call_operand.vmem [shape: f32[32,1], index: 5, kind: input, shape index: {}]
  %s6 = inlined_call_operand.vmem [shape: bf16[16,32], index: 6, kind: input, shape index: {}]
  %s7 = inlined_call_operand.vmem [shape: f32[8,1], index: 7, kind: input, shape index: {}]
  %s8 = inlined_call_operand.hbm [shape: f32[8,64], index: 8, kind: output, shape index: {}]
  %s9 = sld [smem:[#allocation0]]
  $region42: #{tpu_custom_call.1} parent=0
    _
  %s11 = ssub.s32 1, %s9
  %s12 = scalar_select 0, %s11, %s9
  $region1: #{tpu_custom_call.1} parent=0
    #allocation2 [shape = 'u8[4096]{0}', space=vmem, size = 0x1000, scoped, tag = 'output window, operand 0, single buffered']
    #allocation3 [shape = 's32[1]{0}', space=sflag, size = 0x4, scoped, tag = 'scoped memory for tpu_custom_call.1']
    %13 = vsyncpa [#allocation3], 0
    // Predicated region
    $region2: #{tpu_custom_call.1} parent=1 // pred_check
      _
    $region3: #{tpu_custom_call.1} parent=1 // pred_check_branch
      %15 = sbr.rel (0) target = $region5
    $region4: #{tpu_custom_call.1} parent=1 // pred_region
      _
    $region5: #{tpu_custom_call.1} parent=1 // pred_fallthru
      _
    // Predicated region
    $region6: #{tpu_custom_call.1} parent=1 // pred_check
      _
    $region7: #{tpu_custom_call.1} parent=1 // pred_check_branch
      %17 = sbr.rel (0) target = $region9
    $region8: #{tpu_custom_call.1} parent=1 // pred_region
      _
    $region9: #{tpu_custom_call.1} parent=1 // pred_fallthru
      _
    // Predicated region
    $region10: #{tpu_custom_call.1} parent=1 // pred_check
      _
    $region11: #{tpu_custom_call.1} parent=1 // pred_check_branch
      %19 = sbr.rel (0) target = $region13
    $region12: #{tpu_custom_call.1} parent=1 // pred_region
      _
    $region13: #{tpu_custom_call.1} parent=1 // pred_fallthru
      _
    // Predicated region
    $region14: #{tpu_custom_call.1} parent=1 // pred_check
      _
    $region15: #{tpu_custom_call.1} parent=1 // pred_check_branch
      %21 = sbr.rel (0) target = $region17
    $region16: #{tpu_custom_call.1} parent=1 // pred_region
      _
    $region17: #{tpu_custom_call.1} parent=1 // pred_fallthru
      _
    // Predicated region
    $region18: #{tpu_custom_call.1} parent=1 // pred_check
      _
    $region19: #{tpu_custom_call.1} parent=1 // pred_check_branch
      %23 = sbr.rel (0) target = $region21
    $region20: #{tpu_custom_call.1} parent=1 // pred_region
      _
    $region21: #{tpu_custom_call.1} parent=1 // pred_fallthru
      _
    // Predicated region
    $region22: #{tpu_custom_call.1} parent=1 // pred_check
      _
    $region23: #{tpu_custom_call.1} parent=1 // pred_check_branch
      %25 = sbr.rel (0) target = $region25
    $region24: #{tpu_custom_call.1} parent=1 // pred_region
      _
    $region25: #{tpu_custom_call.1} parent=1 // pred_fallthru
      _
    // Predicated region
    $region26: #{tpu_custom_call.1} parent=1 // pred_check
      _
    $region27: #{tpu_custom_call.1} parent=1 // pred_check_branch
      %27 = sbr.rel (0) target = $region29
    $region28: #{tpu_custom_call.1} parent=1 // pred_region
      _
    $region29: #{tpu_custom_call.1} parent=1 // pred_fallthru
      _
    // Predicated region
    $region30: #{tpu_custom_call.1} parent=1 // pred_check
      _
    $region31: #{tpu_custom_call.1} parent=1 // pred_check_branch
      %29 = sbr.rel (0) target = $region33
    $region32: #{tpu_custom_call.1} parent=1 // pred_region
      _
    $region33: #{tpu_custom_call.1} parent=1 // pred_fallthru
      _
    %v31 = vld [vmem:[%s0] sm:$0xf]
    %v32 = vld [vmem:[%s0 + $0x4] sm:$0xf]
    %v33 = vld [vmem:[%s0 + $0x8] sm:$0xf]
    %v34 = vld [vmem:[%s0 + $0xc] sm:$0xf]
    %v35 = vld [vmem:[%s0 + $0x10] sm:$0xf]
    %v36 = vld [vmem:[%s0 + $0x14] sm:$0xf]
    %v37 = vld [vmem:[%s0 + $0x18] sm:$0xf]
    %v38 = vld [vmem:[%s0 + $0x1c] sm:$0xf]
    %v39 = vld [vmem:[%s1] sm:$0xf]
    %v40 = vld [vmem:[%s1 + $0x4] sm:$0xf]
    %v41 = vld [vmem:[%s2] sm:$0xf]
    %v42 = vld [vmem:[%s2 + $0x4] sm:$0xf]
    %v43 = vld [vmem:[%s2 + $0x8] sm:$0xf]
    %v44 = vld [vmem:[%s2 + $0xc] sm:$0xf]
    %v45 = vld [vmem:[%s2 + $0x10] sm:$0xf]
    %v46 = vld [vmem:[%s2 + $0x14] sm:$0xf]
    %v47 = vld [vmem:[%s2 + $0x18] sm:$0xf]
    %v48 = vld [vmem:[%s2 + $0x1c] sm:$0xf]
    %v49 = vld [vmem:[%s3] sm:$0xff]
    %v50 = vld [vmem:[%s3 + $0x8] sm:$0xff]
    %v51 = vld [vmem:[%s3 + $0x10] sm:$0xff]
    %v52 = vld [vmem:[%s3 + $0x18] sm:$0xff]
    %v61 = vunpack.c.l.b16 %v41
    %v62 = vunpack.c.l.b16 %v42
    %v63 = vunpack.c.l.b16 %v43
    %v64 = vunpack.c.l.b16 %v44
    %v65 = vunpack.c.l.b16 %v45
    %v66 = vunpack.c.l.b16 %v46
    %v67 = vunpack.c.l.b16 %v47
    %v68 = vunpack.c.l.b16 %v48
    %v69 = vpack.c.b16 %v62, %v61
    %v70 = vpack.c.b16 %v64, %v63
    %v71 = vpack.c.b16 %v66, %v65
    %v72 = vpack.c.b16 %v68, %v67
    %v75 = vunpack.c.l.b16 %v39
    %v76 = vunpack.c.l.b16 %v40
    %v77 = vpack.c.b16 %v76, %v75
    %vm79 = vcmask 130048
    %v81 = vsel %vm79, %v69, 0
    %v84 = vsel %vm79, %v70, 0
    %v87 = vsel %vm79, %v71, 0
    %v90 = vsel %vm79, %v72, 0
    %92 = vmatpush.bf16.msra.mxu0 0
    %93 = vmatpush.bf16.msra.mxu0 0
    %94 = vmatpush.bf16.msra.mxu0 0
    %95 = vmatpush.bf16.msra.mxu0 0
    %96 = vmatpush.bf16.msra.mxu0 0
    %97 = vmatpush.bf16.msra.mxu0 0
    %98 = vmatpush.bf16.msra.mxu0 0
    %99 = vmatpush.bf16.msra.mxu0 %v77
    %100 = vmatmul.bf16.gmra.mxu0 %v81
    %v101 = vpop.f32.mrf.mxu0
    %v102 = vadd.f32 0.0, %v101
    %v103 = vpop.f32.mrf.mxu0
    %v104 = vadd.f32 0.0, %v103
    %105 = vmatmul.bf16.gmra.mxu0 %v84
    %v106 = vpop.f32.mrf.mxu0
    %v107 = vadd.f32 0.0, %v106
    %v108 = vpop.f32.mrf.mxu0
    %v109 = vadd.f32 0.0, %v108
    %110 = vmatmul.bf16.gmra.mxu0 %v87
    %v111 = vpop.f32.mrf.mxu0
    %v112 = vadd.f32 0.0, %v111
    %v113 = vpop.f32.mrf.mxu0
    %v114 = vadd.f32 0.0, %v113
    %115 = vmatmul.bf16.gmra.mxu0 %v90
    %v116 = vpop.f32.mrf.mxu0
    %v117 = vadd.f32 0.0, %v116
    %v118 = vpop.f32.mrf.mxu0
    %v119 = vadd.f32 0.0, %v118
    %120 = vdwg.mxu0
    %v121 = vpack.c.bf16 %v104, %v102
    %v122 = vpack.c.bf16 %v109, %v107
    %v131 = vunpack.c.l.b16 %v31
    %v132 = vunpack.c.l.b16 %v32
    %v133 = vunpack.c.l.b16 %v33
    %v134 = vunpack.c.l.b16 %v34
    %v135 = vunpack.c.l.b16 %v35
    %v136 = vunpack.c.l.b16 %v36
    %v137 = vunpack.c.l.b16 %v37
    %v138 = vunpack.c.l.b16 %v38
    %v139 = vpack.c.b16 %v132, %v131
    %v140 = vpack.c.b16 %v134, %v133
    %v141 = vpack.c.b16 %v136, %v135
    %v142 = vpack.c.b16 %v138, %v137
    %vm147 = vcmask 523264
    %v149 = vsel %vm147, %v121, 0
    %v152 = vsel %vm147, %v122, 0
    %154 = vmatpush.bf16.msra.mxu0 0
    %155 = vmatpush.bf16.msra.mxu0 0
    %156 = vmatpush.bf16.msra.mxu0 0
    %157 = vmatpush.bf16.msra.mxu0 0
    %158 = vmatpush.bf16.msra.mxu0 %v142
    %159 = vmatpush.bf16.msra.mxu0 %v141
    %160 = vmatpush.bf16.msra.mxu0 %v140
    %161 = vmatpush.bf16.msra.mxu0 %v139
    %162 = vmatmul.bf16.gmra.mxu0 %v149
    %v163 = vpop.f32.mrf.mxu0
    %v164 = vadd.f32 %v112, %v163
    %v165 = vpop.f32.mrf.mxu0
    %v166 = vadd.f32 %v114, %v165
    %167 = vmatmul.bf16.gmra.mxu0 %v152
    %v168 = vpop.f32.mrf.mxu0
    %v169 = vadd.f32 %v117, %v168
    %v170 = vpop.f32.mrf.mxu0
    %v171 = vadd.f32 %v119, %v170
    %172 = vdwg.mxu0
    %174 = vset.pattern.permute.xlu0 0
    %175 = vperm.xlu0 %174, %v49
    %v176 = vpop.permute.xlu0 %175
    %179 = vset.pattern.permute.xlu0 0
    %180 = vperm.xlu0 %179, %v50
    %v181 = vpop.permute.xlu0 %180
    %184 = vset.pattern.permute.xlu0 0
    %185 = vperm.xlu0 %184, %v51
    %v186 = vpop.permute.xlu0 %185
    %189 = vset.pattern.permute.xlu0 0
    %190 = vperm.xlu0 %189, %v52
    %v191 = vpop.permute.xlu0 %190
    %v193 = vadd.f32 %v164, %v176
    %v194 = vadd.f32 %v166, %v181
    %v195 = vadd.f32 %v169, %v186
    %v196 = vadd.f32 %v171, %v191
    %v197 = vmax.f32 %v193, 0.0
    %v198 = vmax.f32 %v194, 0.0
    %v199 = vmax.f32 %v195, 0.0
    %v200 = vmax.f32 %v196, 0.0
    %v201 = vpack.c.bf16 %v198, %v197
    %v202 = vpack.c.bf16 %v200, %v199
    %v203 = vld [vmem:[%s4] sm:$0xf]
    %v204 = vld [vmem:[%s4 + $0x4] sm:$0xf]
    %v205 = vld [vmem:[%s4 + $0x8] sm:$0xf]
    %v206 = vld [vmem:[%s4 + $0xc] sm:$0xf]
    %v207 = vld [vmem:[%s4 + $0x10] sm:$0xf]
    %v208 = vld [vmem:[%s4 + $0x14] sm:$0xf]
    %v209 = vld [vmem:[%s4 + $0x18] sm:$0xf]
    %v210 = vld [vmem:[%s4 + $0x1c] sm:$0xf]
    %v211 = vld [vmem:[%s5] sm:$0xff]
    %v212 = vld [vmem:[%s5 + $0x8] sm:$0xff]
    %v213 = vld [vmem:[%s5 + $0x10] sm:$0xff]
    %v214 = vld [vmem:[%s5 + $0x18] sm:$0xff]
    %v223 = vunpack.c.l.b16 %v203
    %v224 = vunpack.c.l.b16 %v204
    %v225 = vunpack.c.l.b16 %v205
    %v226 = vunpack.c.l.b16 %v206
    %v227 = vunpack.c.l.b16 %v207
    %v228 = vunpack.c.l.b16 %v208
    %v229 = vunpack.c.l.b16 %v209
    %v230 = vunpack.c.l.b16 %v210
    %v231 = vpack.c.b16 %v224, %v223
    %v232 = vpack.c.b16 %v226, %v225
    %v233 = vpack.c.b16 %v228, %v227
    %v234 = vpack.c.b16 %v230, %v229
    %vm235 = vcmask 261120
    %v237 = vsel %vm235, %v231, 0
    %v240 = vsel %vm235, %v232, 0
    %v243 = vsel %vm235, %v233, 0
    %v246 = vsel %vm235, %v234, 0
    %248 = vmatpush.bf16.msra.mxu0 0
    %249 = vmatpush.bf16.msra.mxu0 0
    %250 = vmatpush.bf16.msra.mxu0 0
    %251 = vmatpush.bf16.msra.mxu0 0
    %252 = vmatpush.bf16.msra.mxu0 0
    %253 = vmatpush.bf16.msra.mxu0 0
    %254 = vmatpush.bf16.msra.mxu0 %v202
    %255 = vmatpush.bf16.msra.mxu0 %v201
    %256 = vmatmul.bf16.gmra.mxu0 %v237
    %v257 = vpop.f32.mrf.mxu0
    %v258 = vadd.f32 0.0, %v257
    %v259 = vpop.f32.mrf.mxu0
    %v260 = vadd.f32 0.0, %v259
    %261 = vmatmul.bf16.gmra.mxu0 %v240
    %v262 = vpop.f32.mrf.mxu0
    %v263 = vadd.f32 0.0, %v262
    %v264 = vpop.f32.mrf.mxu0
    %v265 = vadd.f32 0.0, %v264
    %266 = vmatmul.bf16.gmra.mxu0 %v243
    %v267 = vpop.f32.mrf.mxu0
    %v268 = vadd.f32 0.0, %v267
    %v269 = vpop.f32.mrf.mxu0
    %v270 = vadd.f32 0.0, %v269
    %271 = vmatmul.bf16.gmra.mxu0 %v246
    %v272 = vpop.f32.mrf.mxu0
    %v273 = vadd.f32 0.0, %v272
    %v274 = vpop.f32.mrf.mxu0
    %v275 = vadd.f32 0.0, %v274
    %276 = vdwg.mxu0
    %v277 = vpack.c.bf16 %v260, %v258
    %v278 = vpack.c.bf16 %v265, %v263
    %v280 = vsel %vm147, %v277, 0
    %v283 = vsel %vm147, %v278, 0
    %285 = vmatpush.bf16.msra.mxu0 0
    %286 = vmatpush.bf16.msra.mxu0 0
    %287 = vmatpush.bf16.msra.mxu0 0
    %288 = vmatpush.bf16.msra.mxu0 0
    %289 = vmatpush.bf16.msra.mxu0 %v142
    %290 = vmatpush.bf16.msra.mxu0 %v141
    %291 = vmatpush.bf16.msra.mxu0 %v140
    %292 = vmatpush.bf16.msra.mxu0 %v139
    %293 = vmatmul.bf16.gmra.mxu0 %v280
    %v294 = vpop.f32.mrf.mxu0
    %v295 = vadd.f32 %v268, %v294
    %v296 = vpop.f32.mrf.mxu0
    %v297 = vadd.f32 %v270, %v296
    %298 = vmatmul.bf16.gmra.mxu0 %v283
    %v299 = vpop.f32.mrf.mxu0
    %v300 = vadd.f32 %v273, %v299
    %v301 = vpop.f32.mrf.mxu0
    %v302 = vadd.f32 %v275, %v301
    %303 = vdwg.mxu0
    %305 = vset.pattern.permute.xlu0 0
    %306 = vperm.xlu0 %305, %v211
    %v307 = vpop.permute.xlu0 %306
    %310 = vset.pattern.permute.xlu0 0
    %311 = vperm.xlu0 %310, %v212
    %v312 = vpop.permute.xlu0 %311
    %315 = vset.pattern.permute.xlu0 0
    %316 = vperm.xlu0 %315, %v213
    %v317 = vpop.permute.xlu0 %316
    %320 = vset.pattern.permute.xlu0 0
    %321 = vperm.xlu0 %320, %v214
    %v322 = vpop.permute.xlu0 %321
    %v324 = vadd.f32 %v295, %v307
    %v325 = vadd.f32 %v297, %v312
    %v326 = vadd.f32 %v300, %v317
    %v327 = vadd.f32 %v302, %v322
    %v328 = vmax.f32 %v324, 0.0
    %v329 = vmax.f32 %v325, 0.0
    %v330 = vmax.f32 %v326, 0.0
    %v331 = vmax.f32 %v327, 0.0
    %v332 = vpack.c.bf16 %v329, %v328
    %v333 = vpack.c.bf16 %v331, %v330
    %v334 = vld [vmem:[%s6] sm:$0xf]
    %v335 = vld [vmem:[%s6 + $0x4] sm:$0xf]
    %v336 = vld [vmem:[%s7] sm:$0xff]
    %v339 = vunpack.c.l.b16 %v334
    %v340 = vunpack.c.l.b16 %v335
    %v341 = vpack.c.b16 %v340, %v339
    %v343 = vsel %vm235, %v341, 0
    %345 = vmatpush.bf16.msra.mxu0 0
    %346 = vmatpush.bf16.msra.mxu0 0
    %347 = vmatpush.bf16.msra.mxu0 0
    %348 = vmatpush.bf16.msra.mxu0 0
    %349 = vmatpush.bf16.msra.mxu0 0
    %350 = vmatpush.bf16.msra.mxu0 0
    %351 = vmatpush.bf16.msra.mxu0 %v333
    %352 = vmatpush.bf16.msra.mxu0 %v332
    %353 = vmatmul.bf16.gmra.mxu0 %v343
    %v354 = vpop.f32.mrf.mxu0
    %v355 = vadd.f32 0.0, %v354
    %v356 = vpop.f32.mrf.mxu0
    %v357 = vadd.f32 0.0, %v356
    %358 = vdwg.mxu0
    %v359 = vpack.c.bf16 %v355, %v355
    %v361 = vsel %vm147, %v359, 0
    %363 = vmatpush.bf16.msra.mxu0 0
    %364 = vmatpush.bf16.msra.mxu0 0
    %365 = vmatpush.bf16.msra.mxu0 0
    %366 = vmatpush.bf16.msra.mxu0 0
    %367 = vmatpush.bf16.msra.mxu0 %v142
    %368 = vmatpush.bf16.msra.mxu0 %v141
    %369 = vmatpush.bf16.msra.mxu0 %v140
    %370 = vmatpush.bf16.msra.mxu0 %v139
    %371 = vmatmul.bf16.gmra.mxu0 %v361
    %v372 = vpop.f32.mrf.mxu0
    %v373 = vadd.f32 %v357, %v372
    %v374 = vpop.f32.mrf.mxu0
    %375 = vdwg.mxu0
    %377 = vset.pattern.permute.xlu0 0
    %378 = vperm.xlu0 %377, %v336
    %v379 = vpop.permute.xlu0 %378
    %v381 = vadd.f32 %v373, %v379
    %382 = vst.msk [vmem:[#allocation2] sm:$0xff] %vm147, %v381
    // Predicated region
    $region34: #{tpu_custom_call.1} parent=1 // pred_check
      _
    $region35: #{tpu_custom_call.1} parent=1 // pred_check_branch
      %384 = sbr.rel (0) target = $region37
    $region36: #{tpu_custom_call.1} parent=1 // pred_region
      %386 = vsyncadd [#allocation3], 0
      %s388 = sshll.u32 [#allocation2], 4
      %s389 = int_to_ptr.vmem [resolvable:$true] %s388
      %s390 = sshll.u32 %s8, 4
      %s391 = int_to_ptr.hbm [resolvable:$true] %s390
      %393 = dma.vmem_to_hbm [thread:$0]  %s389, 128, %s391, [#allocation3]
    $region37: #{tpu_custom_call.1} parent=1 // pred_fallthru
      _
    // Predicated region
    $region38: #{tpu_custom_call.1} parent=1 // pred_check
      _
    $region39: #{tpu_custom_call.1} parent=1 // pred_check_branch
      %395 = sbr.rel (0) target = $region41
    $region40: #{tpu_custom_call.1} parent=1 // pred_region
      %397 = dma.done [#allocation3], 128
    $region41: #{tpu_custom_call.1} parent=1 // pred_fallthru
      _
    %398 = vsyncpa [#allocation3], 1

</llo_original>
